<compile_context>
chip_gen: v5e
topology: v5e:2x2
jax: 0.10.0
libtpu: 0.0.40
codegen_flags: <defaults>
</compile_context>

<pallas_src>
import math

import jax
import jax.numpy as jnp
from jax.experimental import pallas as pl
from jax.experimental.pallas import tpu as pltpu

# ------------------------- "cfg" constants -------------------------
NUM_CLASSES = 8          # cfg.MODEL.SimpleBaseline.NUM_CLASSES
NUM_QUERIES = 16         # cfg.MODEL.SimpleBaseline.NUM_QUERIES
HIDDEN_DIM = 64          # cfg.MODEL.SimpleBaseline.HIDDEN_DIM
PATCH = 8                # stand-in backbone stride
PIXEL_MEAN = (103.530, 116.280, 123.675)   # cfg.MODEL.PIXEL_MEAN
PIXEL_STD = (57.375, 57.120, 58.395)       # cfg.MODEL.PIXEL_STD
TOPK = 100               # inference top-k


def _round_up(x, m):
    return ((x + m - 1) // m) * m


# --------------- normalization folded into the projection ---------------
def fold_normalization(w_bb, b_bb):
    """Fold (x - mu) / sigma into the projection weights / bias.

    patches_norm @ W + b == patches @ (W * s_k[:, None]) + (bias_k @ W + b)
    with s_k = 1/sigma[c(k)], bias_k = -mu[c(k)]/sigma[c(k)], c(k) = k // P*P,
    matching the (C, P, P) flattening order of the patchify below.
    """
    mu = jnp.asarray(PIXEL_MEAN, jnp.float32)
    sigma = jnp.asarray(PIXEL_STD, jnp.float32)
    scale_k = jnp.repeat(1.0 / sigma, PATCH * PATCH)          # (K,)
    bias_k = jnp.repeat(-mu / sigma, PATCH * PATCH)           # (K,)
    w_fold = (w_bb * scale_k[:, None]).astype(jnp.bfloat16)   # bf16 MXU path
    b_fold = (b_bb + bias_k @ w_bb).reshape(1, HIDDEN_DIM)    # stays f32
    return w_fold, b_fold


# ------------------------- stand-in backbone -------------------------
def _proj_kernel(a_ref, w_ref, b_ref, o_ref):
    # bf16 inputs, f32 accumulation; bias add + ReLU on the f32 accumulator.
    acc = jnp.dot(a_ref[...], w_ref[...], preferred_element_type=jnp.float32)
    o_ref[...] = jnp.maximum(acc + b_ref[...], 0.0)


def backbone_features(images, w_fold_bf16, b_fold):
    # TODO(synk): detectron2 build_backbone() (ResNet+FPN) is external; this is
    # a patchify + linear projection stand-in producing [B, T, HIDDEN_DIM].
    B, C, H, W = images.shape
    P = PATCH
    th, tw = H // P, W // P
    rows, K = B * th * tw, C * P * P

    # Cast before the relayout so the materialized patch array is bf16 (half
    # the HBM traffic of the old f32 path).
    # TODO(synk): the patchify transpose still round-trips HBM once; fusing it
    # into the pallas prologue (allow_input_fusion) or reading NCHW row strips
    # in-kernel would remove that round trip entirely.
    x16 = images.astype(jnp.bfloat16)
    patches = (x16.reshape(B, C, th, P, tw, P)
                  .transpose(0, 2, 4, 1, 3, 5)
                  .reshape(rows, K))

    tm = min(512, _round_up(rows, 8))   # ~512-row tiles, (8,128)-friendly
    feat = pl.pallas_call(
        _proj_kernel,
        out_shape=jax.ShapeDtypeStruct((rows, HIDDEN_DIM), jnp.float32),
        grid=(pl.cdiv(rows, tm),),
        in_specs=[
            pl.BlockSpec((tm, K), lambda i: (i, 0)),           # patch rows
            pl.BlockSpec((K, HIDDEN_DIM), lambda i: (0, 0)),   # folded weights
            pl.BlockSpec((1, HIDDEN_DIM), lambda i: (0, 0)),   # folded bias
        ],
        out_specs=pl.BlockSpec((tm, HIDDEN_DIM), lambda i: (i, 0)),
        compiler_params=pltpu.CompilerParams(
            dimension_semantics=("parallel",),
            vmem_limit_bytes=32 * 1024 * 1024),
    )(patches, w_fold_bf16, b_fold)
    return feat.reshape(B, th * tw, HIDDEN_DIM)


# ------------------------- decoder (hot path) -------------------------
def _decoder_kernel(feat_ref, qt_ref, wh_ref, bh_ref, head_ref):
    # TODO(synk): the exact SimpleBaseline Decoder architecture is external;
    # this is a single query cross-attention block + fused class/box head.
    nb = feat_ref.shape[0]          # images per grid step (static)
    d = qt_ref.shape[0]
    inv_sqrt_d = 1.0 / math.sqrt(d)

    qt = qt_ref[...]                # (D, Q)  queries, pre-transposed
    wh = wh_ref[...]                # (D, C+4) fused class|box head weights
    bh = bh_ref[...]                # (1, C+4)

    for i in range(nb):             # static unroll over the image block
        feat = feat_ref[i]          # (T, D)
        # Scores in (T, Q) layout: feat streams through the MXU in its natural
        # (T, D) layout; no transpose of the large feature tile is needed.
        s = jnp.dot(feat, qt, preferred_element_type=jnp.float32) * inv_sqrt_d
        # softmax over tokens (axis 0)
        s = s - jnp.max(s, axis=0, keepdims=True)
        p = jnp.exp(s)
        attn = p * pl.reciprocal(jnp.sum(p, axis=0, keepdims=True), approx=True)
        # (Q, T) @ (T, D): only the small (T, Q) attention tile is transposed.
        attended = jnp.dot(attn.T, feat, preferred_element_type=jnp.float32)
        # single lane-packed output slab: [class logits | box deltas]
        head_ref[i] = (jnp.dot(attended, wh, preferred_element_type=jnp.float32)
                       + bh)


def decoder_forward(features, queries, w_cls, b_cls, w_box, b_box):
    B, T, D = features.shape
    Q, C = NUM_QUERIES, NUM_CLASSES

    qt = queries.T                                         # (D, Q)
    w_heads = jnp.concatenate([w_cls, w_box], axis=1)      # (D, C+4)
    b_heads = jnp.concatenate([b_cls, b_box]).reshape(1, C + 4)

    # Images per grid step, bounded by an ~8 MiB feature double-buffer budget
    # so the tile also fits v7x's 64 MiB VMEM (v5e/v6e simply take the same).
    per_image = T * D * 4
    nb = int(max(1, min(B, (8 * 1024 * 1024) // (2 * per_image))))
    Bp = _round_up(B, nb)
    if Bp != B:
        features = jnp.pad(features, ((0, Bp - B), (0, 0), (0, 0)))

    heads = pl.pallas_call(
        _decoder_kernel,
        out_shape=jax.ShapeDtypeStruct((Bp, Q, C + 4), jnp.float32),
        grid=(Bp // nb,),
        in_specs=[
            pl.BlockSpec((nb, T, D), lambda i: (i, 0, 0)),   # feature block
            pl.BlockSpec((D, Q), lambda i: (0, 0)),          # queries^T
            pl.BlockSpec((D, C + 4), lambda i: (0, 0)),      # fused head W
            pl.BlockSpec((1, C + 4), lambda i: (0, 0)),      # fused head b
        ],
        out_specs=pl.BlockSpec((nb, Q, C + 4), lambda i: (i, 0, 0)),
        compiler_params=pltpu.CompilerParams(
            dimension_semantics=("parallel",),
            vmem_limit_bytes=32 * 1024 * 1024),
    )(features, qt, w_heads, b_heads)
    return heads[:B]


# ------------------------- inference glue -------------------------
def inference(scores, pred_boxes):
    """One batched top-k over (Q*C) per image; returns per-image dicts."""
    B, Q, C = scores.shape
    k = min(TOPK, Q * C)
    flat = scores.reshape(B, Q * C)
    # TODO(synk): torch uses .topk(100, sorted=False); lax.top_k returns the
    # same element set (sorted) as a single batched XLA op.
    topk_scores, topk_idx = jax.lax.top_k(flat, k)                    # (B, k)
    labels = jnp.tile(jnp.arange(C, dtype=jnp.int32), Q)              # (Q*C,)
    topk_labels = jnp.take(labels, topk_idx)                          # (B, k)
    boxes_flat = jnp.repeat(pred_boxes[:, :, None, :], C, axis=2)
    boxes_flat = boxes_flat.reshape(B, Q * C, 4)
    topk_boxes = jnp.take_along_axis(boxes_flat, topk_idx[..., None], axis=1)
    # TODO(synk): detector_postprocess / Instances packaging is detectron2
    # bookkeeping; output height/width equal the input size here (scale = 1).
    return [{"scores": topk_scores[i], "pred_classes": topk_labels[i],
             "pred_boxes": topk_boxes[i]} for i in range(B)]


# ------------------------- full eval forward -------------------------
def simple_baseline_forward(images, params):
    """images: [B, 3, H, W]; returns (logits, scores, boxes, per-image dicts)."""
    w_bb, b_bb, queries, w_cls, b_cls, w_box, b_box = params
    B, _, H, W = images.shape
    C = NUM_CLASSES

    # pixel normalization folded into the projection weights (no extra pass)
    w_fold, b_fold = fold_normalization(w_bb, b_bb)
    feats = backbone_features(images, w_fold, b_fold)

    # img_box = [0, 0, w, h] per image (preprocess_image)
    img_box = jnp.tile(jnp.asarray([[0.0, 0.0, float(W), float(H)]],
                                   jnp.float32), (B, 1))

    heads = decoder_forward(feats, queries, w_cls, b_cls, w_box, b_box)
    logits = heads[..., :C]                                       # (B, Q, C)
    boxes = jax.nn.sigmoid(heads[..., C:]) * img_box[:, None, :]  # (B, Q, 4)
    scores = jax.nn.sigmoid(logits)                               # (B, Q, C)

    # TODO(synk): training branch (SetCriterion / Hungarian matching loss) is an
    # external module and is not implemented; only the eval path is reproduced.
    return logits, scores, boxes, inference(scores, boxes)


if __name__ == "__main__":
    key = jax.random.PRNGKey(0)
    k_img, k_bb, k_q, k_cls, k_box = jax.random.split(key, 5)

    B, C_IMG, H, W = 2, 3, 32, 32
    images = jax.random.uniform(k_img, (B, C_IMG, H, W), jnp.float32, 0.0, 255.0)

    # deterministic parameter init
    K = C_IMG * PATCH * PATCH
    w_bb = jax.random.normal(k_bb, (K, HIDDEN_DIM), jnp.float32) / math.sqrt(K)
    b_bb = jnp.zeros((HIDDEN_DIM,), jnp.float32)
    queries = jax.random.normal(k_q, (NUM_QUERIES, HIDDEN_DIM), jnp.float32)
    w_cls = jax.random.normal(k_cls, (HIDDEN_DIM, NUM_CLASSES),
                              jnp.float32) / math.sqrt(HIDDEN_DIM)
    b_cls = jnp.zeros((NUM_CLASSES,), jnp.float32)
    w_box = jax.random.normal(k_box, (HIDDEN_DIM, 4),
                              jnp.float32) / math.sqrt(HIDDEN_DIM)
    b_box = jnp.zeros((4,), jnp.float32)

    params = (w_bb, b_bb, queries, w_cls, b_cls, w_box, b_box)
    logits, scores, boxes, results = simple_baseline_forward(images, params)

    jax.block_until_ready((logits, scores, boxes,
                           results[0]["scores"], results[0]["pred_boxes"]))
    assert logits.shape == (B, NUM_QUERIES, NUM_CLASSES)
    assert scores.shape == (B, NUM_QUERIES, NUM_CLASSES)
    assert boxes.shape == (B, NUM_QUERIES, 4)
    assert results[0]["scores"].shape == (TOPK,)
    assert results[0]["pred_boxes"].shape == (TOPK, 4)
    print("KERNEL_OK")
</pallas_src>

<mosaic_0001>
module attributes {stable_mosaic.version = 11 : i64} {
  func.func @_proj_kernel(%arg0: i32, %arg1: memref<32x192xbf16, #tpu.memory_space<vmem>>, %arg2: memref<192x64xbf16, #tpu.memory_space<vmem>>, %arg3: memref<1x64xf32, #tpu.memory_space<vmem>>, %arg4: memref<32x64xf32, #tpu.memory_space<vmem>>) attributes {dimension_semantics = [#tpu.dimension_semantics<parallel>], iteration_bounds = array<i64: 1>, scalar_prefetch = 0 : i64, scratch_operands = 0 : i64, tpu.core_type = #tpu.core_type<tc>, window_params = [{transform_indices = @transform_0, window_bounds = array<i64: 32, 192>}, {pipeline_mode = #tpu.pipeline_mode<synchronous>, transform_indices = @transform_1, window_bounds = array<i64: 192, 64>}, {pipeline_mode = #tpu.pipeline_mode<synchronous>, transform_indices = @transform_2, window_bounds = array<i64: 1, 64>}, {transform_indices = @transform_3, window_bounds = array<i64: 32, 64>}]} {
    %c0 = arith.constant 0 : index
    %c0_0 = arith.constant 0 : index
    %0 = vector.load %arg1[%c0, %c0_0] : memref<32x192xbf16, #tpu.memory_space<vmem>>, vector<32x192xbf16>
    %c0_1 = arith.constant 0 : index
    %c0_2 = arith.constant 0 : index
    %1 = vector.load %arg2[%c0_1, %c0_2] : memref<192x64xbf16, #tpu.memory_space<vmem>>, vector<192x64xbf16>
    %cst = arith.constant dense<0.000000e+00> : vector<32x64xf32>
    %2 = tpu.matmul %0, %1, %cst {dimension_numbers = #tpu.dot_dimension_numbers<[1], [0], [0], [1], [0, 0, 1, 1], [], []>} : vector<32x192xbf16>, vector<192x64xbf16>, vector<32x64xf32> -> vector<32x64xf32>
    %c0_3 = arith.constant 0 : index
    %c0_4 = arith.constant 0 : index
    %3 = vector.load %arg3[%c0_3, %c0_4] : memref<1x64xf32, #tpu.memory_space<vmem>>, vector<1x64xf32>
    %4 = vector.broadcast %3 : vector<1x64xf32> to vector<32x64xf32>
    %5 = arith.addf %2, %4 : vector<32x64xf32>
    %cst_5 = arith.constant 0.000000e+00 : f32
    %6 = vector.broadcast %cst_5 : f32 to vector<32x64xf32>
    %7 = arith.maximumf %5, %6 : vector<32x64xf32>
    %c0_6 = arith.constant 0 : index
    %c0_7 = arith.constant 0 : index
    %8 = vector.load %arg4[%c0_6, %c0_7] : memref<32x64xf32, #tpu.memory_space<vmem>>, vector<32x64xf32>
    tpu.vector_store %arg4[%c0_6, %c0_7], %7 {strides = array<i32>} : memref<32x64xf32, #tpu.memory_space<vmem>>, vector<32x64xf32>,
    return
  }
  func.func @transform_0(%arg0: i32) -> (i32, i32) {
    %c0_i32 = arith.constant 0 : i32
    %c0_i32_0 = arith.constant 0 : i32
    return %arg0, %c0_i32 : i32, i32
  }
  func.func @transform_1(%arg0: i32) -> (i32, i32) {
    %c0_i32 = arith.constant 0 : i32
    %c0_i32_0 = arith.constant 0 : i32
    %c0_i32_1 = arith.constant 0 : i32
    return %c0_i32, %c0_i32_0 : i32, i32
  }
  func.func @transform_2(%arg0: i32) -> (i32, i32) {
    %c0_i32 = arith.constant 0 : i32
    %c0_i32_0 = arith.constant 0 : i32
    %c0_i32_1 = arith.constant 0 : i32
    return %c0_i32, %c0_i32_0 : i32, i32
  }
  func.func @transform_3(%arg0: i32) -> (i32, i32) {
    %c0_i32 = arith.constant 0 : i32
    %c0_i32_0 = arith.constant 0 : i32
    return %arg0, %c0_i32 : i32, i32
  }
}

</mosaic_0001>

<llo_original>
// kernel: tpu_custom_call.1
$region0: #{tpu_custom_call.1}
  #allocation0 [shape = 'u32[]', space=smem, size = 0x4, offset = 0x4, fixed_abs, tag = 'smem constant byte address 0x4 - core index']
  #allocation1 [shape = 'u32[72,128]{1,0:T(1,128)}', space=vmem, size = 0x9000, scoped, tag = 'internal scratch']
  %s0 = inlined_call_operand.vmem [shape: bf16[32,192], index: 0, kind: input, shape index: {}]
  %s1 = inlined_call_operand.vmem [shape: bf16[192,64], index: 1, kind: input, shape index: {}]
  %s2 = inlined_call_operand.vmem [shape: f32[1,64], index: 2, kind: input, shape index: {}]
  %s3 = inlined_call_operand.hbm [shape: f32[32,64], index: 3, kind: output, shape index: {}]
  %s4 = sld [smem:[#allocation0]]
  $region22: #{tpu_custom_call.1} parent=0
    _
  %s6 = ssub.s32 1, %s4
  %s7 = scalar_select 0, %s6, %s4
  $region1: #{tpu_custom_call.1} parent=0
    #allocation2 [shape = 'u8[16384]{0}', space=vmem, size = 0x4000, scoped, tag = 'output window, operand 0, single buffered']
    #allocation3 [shape = 's32[1]{0}', space=sflag, size = 0x4, scoped, tag = 'scoped memory for tpu_custom_call.1']
    %8 = vsyncpa [#allocation3], 0
    // Predicated region
    $region2: #{tpu_custom_call.1} parent=1 // pred_check
      _
    $region3: #{tpu_custom_call.1} parent=1 // pred_check_branch
      %10 = sbr.rel (0) target = $region5
    $region4: #{tpu_custom_call.1} parent=1 // pred_region
      _
    $region5: #{tpu_custom_call.1} parent=1 // pred_fallthru
      _
    // Predicated region
    $region6: #{tpu_custom_call.1} parent=1 // pred_check
      _
    $region7: #{tpu_custom_call.1} parent=1 // pred_check_branch
      %12 = sbr.rel (0) target = $region9
    $region8: #{tpu_custom_call.1} parent=1 // pred_region
      _
    $region9: #{tpu_custom_call.1} parent=1 // pred_fallthru
      _
    // Predicated region
    $region10: #{tpu_custom_call.1} parent=1 // pred_check
      _
    $region11: #{tpu_custom_call.1} parent=1 // pred_check_branch
      %14 = sbr.rel (0) target = $region13
    $region12: #{tpu_custom_call.1} parent=1 // pred_region
      _
    $region13: #{tpu_custom_call.1} parent=1 // pred_fallthru
      _
    %v16 = vld [vmem:[%s0] sm:$0xff]
    %v17 = vld [vmem:[%s0 + $0x8] sm:$0xff]
    %v18 = vld [vmem:[%s0 + $0x10] sm:$0xff]
    %v19 = vld [vmem:[%s0 + $0x18] sm:$0xff]
    %v20 = vld [vmem:[%s1] sm:$0xf]
    %v21 = vld [vmem:[%s1 + $0x4] sm:$0xf]
    %v22 = vld [vmem:[%s1 + $0x8] sm:$0xf]
    %v23 = vld [vmem:[%s1 + $0xc] sm:$0xf]
    %v24 = vld [vmem:[%s1 + $0x10] sm:$0xf]
    %v25 = vld [vmem:[%s1 + $0x14] sm:$0xf]
    %v26 = vld [vmem:[%s1 + $0x18] sm:$0xf]
    %v27 = vld [vmem:[%s1 + $0x1c] sm:$0xf]
    %v28 = vld [vmem:[%s1 + $0x20] sm:$0xf]
    %v29 = vld [vmem:[%s1 + $0x24] sm:$0xf]
    %v30 = vld [vmem:[%s1 + $0x28] sm:$0xf]
    %v31 = vld [vmem:[%s1 + $0x2c] sm:$0xf]
    %v32 = vld [vmem:[%s1 + $0x30] sm:$0xf]
    %v33 = vld [vmem:[%s1 + $0x34] sm:$0xf]
    %v34 = vld [vmem:[%s1 + $0x38] sm:$0xf]
    %v35 = vld [vmem:[%s1 + $0x3c] sm:$0xf]
    %v36 = vld [vmem:[%s1 + $0x40] sm:$0xf]
    %v37 = vld [vmem:[%s1 + $0x44] sm:$0xf]
    %v38 = vld [vmem:[%s1 + $0x48] sm:$0xf]
    %v39 = vld [vmem:[%s1 + $0x4c] sm:$0xf]
    %v40 = vld [vmem:[%s1 + $0x50] sm:$0xf]
    %v41 = vld [vmem:[%s1 + $0x54] sm:$0xf]
    %v42 = vld [vmem:[%s1 + $0x58] sm:$0xf]
    %v43 = vld [vmem:[%s1 + $0x5c] sm:$0xf]
    %v44 = vld [vmem:[%s2] sm:$0x1]
    %v46 = vperm.slane %v44, 0
    %v52 = vunpack.c.l.b16 %v16
    %v53 = vunpack.c.h.b16 %v16
    %v54 = vunpack.c.l.b16 %v17
    %v55 = vunpack.c.h.b16 %v17
    %v56 = vunpack.c.l.b16 %v18
    %v57 = vunpack.c.h.b16 %v18
    %v58 = vunpack.c.l.b16 %v19
    %v59 = vunpack.c.h.b16 %v19
    %v60 = vpack.c.b16 %v54, %v52
    %v61 = vpack.c.b16 %v55, %v53
    %v62 = vpack.c.b16 %v58, %v56
    %v63 = vpack.c.b16 %v59, %v57
    %v90 = vunpack.c.l.b16 %v20
    %v91 = vunpack.c.l.b16 %v21
    %v92 = vunpack.c.l.b16 %v22
    %v93 = vunpack.c.l.b16 %v23
    %v94 = vunpack.c.l.b16 %v24
    %v95 = vunpack.c.l.b16 %v25
    %v96 = vunpack.c.l.b16 %v26
    %v97 = vunpack.c.l.b16 %v27
    %v98 = vunpack.c.l.b16 %v28
    %v99 = vunpack.c.l.b16 %v29
    %v100 = vunpack.c.l.b16 %v30
    %v101 = vunpack.c.l.b16 %v31
    %v102 = vunpack.c.l.b16 %v32
    %v103 = vunpack.c.l.b16 %v33
    %v104 = vunpack.c.l.b16 %v34
    %v105 = vunpack.c.l.b16 %v35
    %v106 = vunpack.c.l.b16 %v36
    %v107 = vunpack.c.l.b16 %v37
    %v108 = vunpack.c.l.b16 %v38
    %v109 = vunpack.c.l.b16 %v39
    %v110 = vunpack.c.l.b16 %v40
    %v111 = vunpack.c.l.b16 %v41
    %v112 = vunpack.c.l.b16 %v42
    %v113 = vunpack.c.l.b16 %v43
    %v114 = vpack.c.b16 %v91, %v90
    %v115 = vpack.c.b16 %v93, %v92
    %v116 = vpack.c.b16 %v95, %v94
    %v117 = vpack.c.b16 %v97, %v96
    %v118 = vpack.c.b16 %v99, %v98
    %v119 = vpack.c.b16 %v101, %v100
    %v120 = vpack.c.b16 %v103, %v102
    %v121 = vpack.c.b16 %v105, %v104
    %v122 = vpack.c.b16 %v107, %v106
    %v123 = vpack.c.b16 %v109, %v108
    %v124 = vpack.c.b16 %v111, %v110
    %v125 = vpack.c.b16 %v113, %v112
    %vm138 = vcmask 523264
    %v140 = vsel %vm138, %v61, 0
    %v143 = vsel %vm138, %v63, 0
    %145 = vmatpush.bf16.msra.mxu0 %v121
    %146 = vmatpush.bf16.msra.mxu0 %v120
    %147 = vmatpush.bf16.msra.mxu0 %v119
    %148 = vmatpush.bf16.msra.mxu0 %v118
    %149 = vmatpush.bf16.msra.mxu0 %v117
    %150 = vmatpush.bf16.msra.mxu0 %v116
    %151 = vmatpush.bf16.msra.mxu0 %v115
    %152 = vmatpush.bf16.msra.mxu0 %v114
    %153 = vmatmul.bf16.gmra.mxu0 %v60
    %v154 = vpop.f32.mrf.mxu0
    %v155 = vadd.f32 %v46, %v154
    %v156 = vpop.f32.mrf.mxu0
    %v157 = vadd.f32 %v46, %v156
    %158 = vmatmul.bf16.gmra.mxu0 %v62
    %v159 = vpop.f32.mrf.mxu0
    %v160 = vadd.f32 %v46, %v159
    %v161 = vpop.f32.mrf.mxu0
    %v162 = vadd.f32 %v46, %v161
    %163 = vdwg.mxu0
    %164 = vmatpush.bf16.msra.mxu0 0
    %165 = vmatpush.bf16.msra.mxu0 0
    %166 = vmatpush.bf16.msra.mxu0 0
    %167 = vmatpush.bf16.msra.mxu0 0
    %168 = vmatpush.bf16.msra.mxu0 %v125
    %169 = vmatpush.bf16.msra.mxu0 %v124
    %170 = vmatpush.bf16.msra.mxu0 %v123
    %171 = vmatpush.bf16.msra.mxu0 %v122
    %172 = vmatmul.bf16.gmra.mxu0 %v140
    %v173 = vpop.f32.mrf.mxu0
    %v174 = vadd.f32 %v155, %v173
    %v175 = vpop.f32.mrf.mxu0
    %v176 = vadd.f32 %v157, %v175
    %177 = vmatmul.bf16.gmra.mxu0 %v143
    %v178 = vpop.f32.mrf.mxu0
    %v179 = vadd.f32 %v160, %v178
    %v180 = vpop.f32.mrf.mxu0
    %v181 = vadd.f32 %v162, %v180
    %182 = vdwg.mxu0
    %v183 = vmax.f32 %v174, 0.0
    %v184 = vmax.f32 %v176, 0.0
    %v185 = vmax.f32 %v179, 0.0
    %v186 = vmax.f32 %v181, 0.0
    %187 = vst.msk [vmem:[#allocation2] sm:$0xff] %vm138, %v183
    %188 = vst.msk [vmem:[#allocation2 + $0x8] sm:$0xff] %vm138, %v184
    %189 = vst.msk [vmem:[#allocation2 + $0x10] sm:$0xff] %vm138, %v185
    %190 = vst.msk [vmem:[#allocation2 + $0x18] sm:$0xff] %vm138, %v186
    // Predicated region
    $region14: #{tpu_custom_call.1} parent=1 // pred_check
      _
    $region15: #{tpu_custom_call.1} parent=1 // pred_check_branch
      %192 = sbr.rel (0) target = $region17
    $region16: #{tpu_custom_call.1} parent=1 // pred_region
      %194 = vsyncadd [#allocation3], 0
      %s195 = sshll.u32 [#allocation2], 4
      %s196 = int_to_ptr.vmem [resolvable:$true] %s195
      %s197 = sshll.u32 %s3, 4
      %s198 = int_to_ptr.hbm [resolvable:$true] %s197
      %203 = dma.vmem_to_hbm [thread:$0]  %s196, 512, %s198, [#allocation3], 128, 128, 8
    $region17: #{tpu_custom_call.1} parent=1 // pred_fallthru
      _
    // Predicated region
    $region18: #{tpu_custom_call.1} parent=1 // pred_check
      _
    $region19: #{tpu_custom_call.1} parent=1 // pred_check_branch
      %205 = sbr.rel (0) target = $region21
    $region20: #{tpu_custom_call.1} parent=1 // pred_region
      %207 = dma.done [#allocation3], 512
    $region21: #{tpu_custom_call.1} parent=1 // pred_fallthru
      _
    %208 = vsyncpa [#allocation3], 1

</llo_original>
